<compile_context>
chip_gen: v6e
topology: v6e:2x2x1
jax: 0.10.0
libtpu: 0.0.40
codegen_flags: <defaults>
</compile_context>

<pallas_src>
import functools

import jax
import jax.numpy as jnp
from jax.experimental import pallas as pl
from jax.experimental.pallas import tpu as pltpu


def _round_up(x, m):
    return (x + m - 1) // m * m


def _reduce_kernel(x_ref, o_ref, acc_ref, *, inv_c, c_tile, hw_tile, c_rem):
    # Grid (N, HW_tiles, C_tiles); reduction axis (C) is last / "arbitrary".
    # x_ref:   (c_tile, hw_tile)   (batch dim squeezed)
    # o_ref:   (1, hw_tile)
    # acc_ref: (8, hw_tile) float32 scratch, persists across the C axis.
    c_idx = pl.program_id(2)
    last = pl.num_programs(2) - 1

    @pl.when(c_idx == 0)
    def _():
        acc_ref[...] = jnp.zeros_like(acc_ref)

    xv = x_ref[...].astype(jnp.float32)
    if c_rem:
        # Ragged final channel tile: zero the out-of-range channel rows in-kernel
        # (cheap VPU select) instead of padding the tensor in HBM.
        row = jax.lax.broadcasted_iota(jnp.int32, (c_tile, 1), 0)
        valid = jnp.where(c_idx == last, c_rem, c_tile)
        xv = jnp.where(row < valid, xv, 0.0)

    # Sublane-group accumulation: (c_tile, hw) -> (c_tile//8, 8, hw), sum the
    # leading axis = plain vreg adds. No per-step cross-sublane XLU reduce.
    acc_ref[...] += xv.reshape(c_tile // 8, 8, hw_tile).sum(axis=0)

    @pl.when(c_idx == last)
    def _():
        o_ref[...] = (
            acc_ref[...].sum(axis=0, keepdims=True) * inv_c
        ).astype(o_ref.dtype)


def _fold_n_kernel(x_ref, o_ref, *, inv_c):
    # Whole channel axis in one block; batch folded into the block.
    # x_ref: (n_tile, C, hw_tile) ; o_ref: (n_tile, hw_tile)
    o_ref[...] = (
        x_ref[...].astype(jnp.float32).sum(axis=1) * inv_c
    ).astype(o_ref.dtype)


def avg_pool_dim1(x, *, block_bytes=8 << 20, hw_tile_cap=4096):
    """Equivalent of torch.mean(x, dim=1, keepdim=False) for NCHW input."""
    N, C, H, W = x.shape
    HW = H * W
    x2 = x.reshape(N, C, HW)

    itemsize = jnp.dtype(x.dtype).itemsize
    pack = max(8, 32 // itemsize)  # sublane packing: f32->8, bf16->16, int8->32

    # Lane-dense spatial tile: multiple of 128, never exceeding HW (full-dim
    # escape when HW < 128). Ragged last tile is handled by Pallas masking.
    if HW <= 128:
        hw_tile = HW
    else:
        hw_tile = min(hw_tile_cap, (HW // 128) * 128)

    # Channel tile sized by a byte budget (dtype-aware), multiple of the pack.
    max_c = max(pack, (block_bytes // (hw_tile * itemsize)) // pack * pack)

    cost = pl.CostEstimate(
        flops=N * C * HW,
        transcendentals=0,
        bytes_accessed=N * C * HW * itemsize + N * HW * itemsize,
    )
    vmem_limit = 40 << 20  # double-buffered ~8 MiB input + output + scratch

    if C <= max_c:
        # Whole channel axis fits one block -> no reduction grid axis.
        # Fold the batch dim into the block so each step still moves multi-MiB.
        n_tile = max(1, block_bytes // max(1, C * hw_tile * itemsize))
        if n_tile >= N:
            n_tile = N
        elif n_tile >= 8:
            n_tile = (n_tile // 8) * 8  # keep output block sublane-aligned
        else:
            n_tile = 1

        # v7x megacore: keep at least 2 shards on the parallel axes.
        if pl.cdiv(N, n_tile) * pl.cdiv(HW, hw_tile) < 2:
            if HW > 128:
                hw_tile = _round_up(hw_tile // 2, 128)
            elif N > 1:
                n_tile = 1

        grid = (pl.cdiv(N, n_tile), pl.cdiv(HW, hw_tile))
        out = pl.pallas_call(
            functools.partial(_fold_n_kernel, inv_c=1.0 / C),
            out_shape=jax.ShapeDtypeStruct((N, HW), x.dtype),
            grid_spec=pltpu.PrefetchScalarGridSpec(
                num_scalar_prefetch=0,
                grid=grid,
                in_specs=[
                    pl.BlockSpec((n_tile, C, hw_tile), lambda n, t: (n, 0, t))
                ],
                out_specs=pl.BlockSpec((n_tile, hw_tile), lambda n, t: (n, t)),
            ),
            compiler_params=pltpu.CompilerParams(
                dimension_semantics=("parallel", "parallel"),
                vmem_limit_bytes=vmem_limit,
            ),
            cost_estimate=cost,
        )(x2)
    else:
        c_tile = max_c            # multiple of pack (>= 8), ragged tail masked
        c_rem = C % c_tile

        # v7x megacore occupancy for single-image / single-tile spatial inputs.
        if N * pl.cdiv(HW, hw_tile) < 2 and HW > 128:
            hw_tile = _round_up(hw_tile // 2, 128)

        grid = (N, pl.cdiv(HW, hw_tile), pl.cdiv(C, c_tile))
        out = pl.pallas_call(
            functools.partial(
                _reduce_kernel,
                inv_c=1.0 / C,
                c_tile=c_tile,
                hw_tile=hw_tile,
                c_rem=c_rem,
            ),
            out_shape=jax.ShapeDtypeStruct((N, HW), x.dtype),
            grid_spec=pltpu.PrefetchScalarGridSpec(
                num_scalar_prefetch=0,
                grid=grid,
                in_specs=[
                    pl.BlockSpec(
                        (None, c_tile, hw_tile), lambda n, t, c: (n, c, t)
                    )
                ],
                out_specs=pl.BlockSpec((1, hw_tile), lambda n, t, c: (n, t)),
                scratch_shapes=[pltpu.VMEM((8, hw_tile), jnp.float32)],
            ),
            compiler_params=pltpu.CompilerParams(
                dimension_semantics=("parallel", "parallel", "arbitrary"),
                vmem_limit_bytes=vmem_limit,
            ),
            cost_estimate=cost,
        )(x2)

    return out.reshape(N, H, W)


if __name__ == "__main__":
    key = jax.random.PRNGKey(0)

    # Primary test: small NCHW f32 input (whole-C fold-N path).
    x = jax.random.normal(key, (2, 4, 16, 16), dtype=jnp.float32)
    y = avg_pool_dim1(x)
    jax.block_until_ready(y)
    ref = jnp.mean(x, axis=1)
    assert y.shape == ref.shape == (2, 16, 16)
    assert jnp.allclose(y, ref, atol=1e-6, rtol=1e-6)

    # Ragged spatial size (HW=49: full-dim lane block, no padding anywhere).
    x2 = jax.random.normal(jax.random.PRNGKey(1), (2, 4, 7, 7), dtype=jnp.float32)
    y2 = avg_pool_dim1(x2)
    jax.block_until_ready(y2)
    ref2 = jnp.mean(x2, axis=1)
    assert y2.shape == ref2.shape == (2, 7, 7)
    assert jnp.allclose(y2, ref2, atol=1e-6, rtol=1e-6)

    # bf16 input: f32 accumulation inside the kernel, cast on store.
    xb = x.astype(jnp.bfloat16)
    yb = avg_pool_dim1(xb)
    jax.block_until_ready(yb)
    refb = jnp.mean(xb.astype(jnp.float32), axis=1)
    assert yb.dtype == jnp.bfloat16
    assert jnp.allclose(yb.astype(jnp.float32), refb, atol=2e-2, rtol=2e-2)

    # Force the C-reduction path (tiny byte budget) incl. ragged last C tile
    # masked in-kernel (C=20, c_tile=8 -> remainder of 4 channels).
    x3 = jax.random.normal(jax.random.PRNGKey(2), (2, 20, 16, 16), dtype=jnp.float32)
    y3 = avg_pool_dim1(x3, block_bytes=4096)
    jax.block_until_ready(y3)
    ref3 = jnp.mean(x3, axis=1)
    assert y3.shape == ref3.shape == (2, 16, 16)
    assert jnp.allclose(y3, ref3, atol=1e-5, rtol=1e-5)

    print("KERNEL_OK")
</pallas_src>

<mosaic_0001>
module attributes {stable_mosaic.version = 11 : i64} {
  func.func @_fold_n_kernel(%arg0: i32, %arg1: i32, %arg2: memref<2x4x128xf32, #tpu.memory_space<vmem>>, %arg3: memref<2x128xf32, #tpu.memory_space<vmem>>) attributes {dimension_semantics = [#tpu.dimension_semantics<parallel>, #tpu.dimension_semantics<parallel>], iteration_bounds = array<i64: 1, 2>, scalar_prefetch = 0 : i64, scratch_operands = 0 : i64, tpu.core_type = #tpu.core_type<tc>, window_params = [{transform_indices = @transform_0, window_bounds = array<i64: 2, 4, 128>}, {transform_indices = @transform_1, window_bounds = array<i64: 2, 128>}]} {
    %c0 = arith.constant 0 : index
    %c0_0 = arith.constant 0 : index
    %c0_1 = arith.constant 0 : index
    %0 = vector.load %arg2[%c0, %c0_0, %c0_1] : memref<2x4x128xf32, #tpu.memory_space<vmem>>, vector<2x4x128xf32>
    %cst = arith.constant dense<0.000000e+00> : vector<2x128xf32>
    %1 = vector.multi_reduction <add>, %0, %cst [1] : vector<2x4x128xf32> to vector<2x128xf32>
    %cst_2 = arith.constant 2.500000e-01 : f32
    %2 = vector.broadcast %cst_2 : f32 to vector<2x128xf32>
    %3 = arith.mulf %1, %2 : vector<2x128xf32>
    %c0_3 = arith.constant 0 : index
    %c0_4 = arith.constant 0 : index
    %4 = vector.load %arg3[%c0_3, %c0_4] : memref<2x128xf32, #tpu.memory_space<vmem>>, vector<2x128xf32>
    tpu.vector_store %arg3[%c0_3, %c0_4], %3 {strides = array<i32>} : memref<2x128xf32, #tpu.memory_space<vmem>>, vector<2x128xf32>,
    return
  }
  func.func @transform_0(%arg0: i32, %arg1: i32) -> (i32, i32, i32) {
    %c0_i32 = arith.constant 0 : i32
    %c0_i32_0 = arith.constant 0 : i32
    return %arg0, %c0_i32, %arg1 : i32, i32, i32
  }
  func.func @transform_1(%arg0: i32, %arg1: i32) -> (i32, i32) {
    %c0_i32 = arith.constant 0 : i32
    return %arg0, %arg1 : i32, i32
  }
}

</mosaic_0001>

<llo_original>
// kernel: tpu_custom_call.1
$region0: #{tpu_custom_call.1}
  #allocation0 [shape = 'u32[]', space=smem, size = 0x4, offset = 0x4, fixed_abs, tag = 'smem constant byte address 0x4 - core index']
  #allocation1 [shape = 'u32[144,128]{1,0:T(1,128)}', space=vmem, size = 0x12000, scoped, tag = 'internal scratch']
  %s0 = inlined_call_operand.hbm [shape: f32[2,4,256], index: 0, kind: input, shape index: {}]
  %s1 = inlined_call_operand.hbm [shape: f32[2,256], index: 1, kind: output, shape index: {}]
  %s2 = sld [smem:[#allocation0]]
  $region41: #{tpu_custom_call.1} parent=0
    _
  %s4 = ssub.s32 1, %s2
  %s5 = scalar_select 0, %s4, %s2
  $region1: #{tpu_custom_call.1} parent=0
    #allocation2 [shape = 'u8[8192]{0}', space=vmem, size = 0x2000, scoped, tag = 'input window, operand 0']
    #allocation3 [shape = 's32[2]{0}', space=sflag, size = 0x8, scoped, tag = 'scoped memory for tpu_custom_call.1']
    #allocation4 [shape = 's32[2]{0}', space=sflag, size = 0x8, scoped, tag = 'scoped memory for tpu_custom_call.1']
    #allocation5 [shape = 'u8[2048]{0}', space=vmem, size = 0x800, scoped, tag = 'output window, operand 0']
    %6 = vsyncpa [#allocation3], 0
    %s7 = scalar_lea.sflag [#allocation3], 1
    %8 = vsyncpa %s7, 0
    %9 = vsyncpa [#allocation4], 0
    %s10 = scalar_lea.sflag [#allocation4], 1
    %11 = vsyncpa %s10, 0
    loop: start=0, step=1, limit=4
    $region2: #{tpu_custom_call.1} parent=1 // loop_pre_header
      _
    $region3: #{tpu_custom_call.1} parent=1 // loop_header
      %s13 = sphi 0, %s17
      %p14 = scmp.ge.s32.totalorder %s13, 4
      %s20 = sphi 0, %s32
      %s21 = sphi 0, %s28
      %s22 = sphi 0, %s20
      %s23 = sphi 0, %s21
      %s24 = sphi 0, %s22
      %s25 = sphi 0, %s23
      %s37 = sphi 0, %s39
      %s40 = sphi 0, %s37
      %s41 = sphi 0, %s40
      %s57 = sphi 0, %s41
      %s65 = sphi 0, %s67
      %s68 = sphi 0, %s65
      %s69 = sphi 0, %s68
      %s85 = sphi 0, %s69
    $region4: #{tpu_custom_call.1} parent=1 // loop_header_branch
      %16 = sbr.rel (%p14) target = $region8
    $region5: #{tpu_custom_call.1} parent=1 // loop_body
      %s18 = ssub.s32 %s13, 1
      %s19 = ssub.s32 %s13, 2
      %s26 = sadd.s32 1, %s21
      %p27 = scmp.ge.s32.totalorder %s26, 2
      %s28 = scalar_select %p27, 0, %s26
      %s29 = sadd.s32 1, %s20
      %s30 = scalar_select %p27, %s29, %s20
      %p31 = scmp.ge.s32.totalorder %s30, 1
      %s32 = scalar_select %p31, 0, %s30
      %s33 = ssub.s32 %s20, %s32
      %s34 = ssub.s32 %s21, %s28
      %s35 = sor.u32 %s33, %s34
      %p36 = scmp.eq.s32.totalorder %s35, 0
      %s38 = sadd.s32 %s37, 1
      %s39 = scalar_select %p36, %s37, %s38
      %p42 = pneg %p36
      %p43 = scmp.eq.s32.totalorder %s13, 1
      %p44 = por %p42, %p43
      %p45 = scmp.ne.s32.totalorder %s37, %s40
      %p46 = scmp.eq.s32.totalorder %s13, 0
      %p47 = por %p45, %p46
      %p48 = scmp.ne.s32.totalorder %s37, %s40
      %p49 = scmp.eq.s32.totalorder %s18, 1
      %p50 = por %p48, %p49
      %p51 = scmp.ne.s32.totalorder %s40, %s41
      %p52 = scmp.eq.s32.totalorder %s18, 0
      %p53 = por %p51, %p52
      %p54 = scmp.ne.s32.totalorder %s40, %s41
      %p55 = scmp.eq.s32.totalorder %s19, 1
      %p56 = por %p54, %p55
      %p58 = scmp.ne.s32.totalorder %s41, %s57
      %p59 = scmp.eq.s32.totalorder %s19, 0
      %p60 = por %p58, %p59
      %s61 = ssub.s32 %s20, %s32
      %s62 = ssub.s32 %s21, %s28
      %s63 = sor.u32 %s61, %s62
      %p64 = scmp.eq.s32.totalorder %s63, 0
      %s66 = sadd.s32 %s65, 1
      %s67 = scalar_select %p64, %s65, %s66
      %p70 = pneg %p64
      %p71 = scmp.eq.s32.totalorder %s13, 1
      %p72 = por %p70, %p71
      %p73 = scmp.ne.s32.totalorder %s65, %s68
      %p74 = scmp.eq.s32.totalorder %s13, 0
      %p75 = por %p73, %p74
      %p76 = scmp.ne.s32.totalorder %s65, %s68
      %p77 = scmp.eq.s32.totalorder %s18, 1
      %p78 = por %p76, %p77
      %p79 = scmp.ne.s32.totalorder %s68, %s69
      %p80 = scmp.eq.s32.totalorder %s18, 0
      %p81 = por %p79, %p80
      %p82 = scmp.ne.s32.totalorder %s68, %s69
      %p83 = scmp.eq.s32.totalorder %s19, 1
      %p84 = por %p82, %p83
      %p86 = scmp.ne.s32.totalorder %s69, %s85
      %p87 = scmp.eq.s32.totalorder %s19, 0
      %p88 = por %p86, %p87
      %p89 = scmp.le.s32.totalorder 1, %s13
      %p90 = scmp.lt.s32.totalorder %s13, 3
      %p91 = pnand %p89, %p90
      %p92 = pneg %p91
      // Predicated region
      $region9: #{tpu_custom_call.1} parent=5 // pred_check
        _
      $region10: #{tpu_custom_call.1} parent=5 // pred_check_branch
        %94 = sbr.rel (%p91) target = $region12
      $region11: #{tpu_custom_call.1} parent=5 // pred_region
        %s95 = ssub.s32 %s13, 1
      $region12: #{tpu_custom_call.1} parent=5 // pred_fallthru
        _
      %p96 = scmp.lt.s32.totalorder %s13, 2
      // Predicated region
      $region13: #{tpu_custom_call.1} parent=5 // pred_check
        %p97 = pneg %p96
      $region14: #{tpu_custom_call.1} parent=5 // pred_check_branch
        %99 = sbr.rel (%p97) target = $region16
      $region15: #{tpu_custom_call.1} parent=5 // pred_region
        // Predicated region
        $region17: #{tpu_custom_call.1} parent=15 // pred_check
          %p100 = pneg %p47
        $region18: #{tpu_custom_call.1} parent=15 // pred_check_branch
          %102 = sbr.rel (%p100) target = $region20
        $region19: #{tpu_custom_call.1} parent=15 // pred_region
          %s103 = sand.u32 %s37, 1
          %s104 = scalar_lea.sflag [#allocation3], %s103
          %s105 = sand.u32 %s37, 1
          %s106 = smul.addr %s105, 8
          %s107 = scalar_lea.vmem [#allocation2], %s106
          %s108 = smul.u32 2, %s20
          %s110 = ssub.s32 128, 128
          %111 = vsyncadd %s104, %s110
          %s112 = smul.addr %s108, 2
          %s113 = sadd.s32 %s21, %s112
          %s114 = smul.addr %s113, 64
          %s115 = scalar_lea.hbm %s0, %s114
          %s116 = sshll.u32 %s107, 4
          %s117 = int_to_ptr.vmem [resolvable:$true] %s116
          %122 = dma.hbm_to_vmem [thread:$0]  %s115, 128, %s117, %s104, 128, 64, 4
        $region20: #{tpu_custom_call.1} parent=15 // pred_fallthru
          _
      $region16: #{tpu_custom_call.1} parent=5 // pred_fallthru
        _
      %p123 = scmp.le.s32.totalorder 1, %s13
      %p124 = scmp.lt.s32.totalorder %s13, 3
      %p125 = pnand %p123, %p124
      %p126 = pneg %p125
      // Predicated region
      $region21: #{tpu_custom_call.1} parent=5 // pred_check
        _
      $region22: #{tpu_custom_call.1} parent=5 // pred_check_branch
        %128 = sbr.rel (%p125) target = $region24
      $region23: #{tpu_custom_call.1} parent=5 // pred_region
        %s129 = ssub.s32 %s13, 1
        %s130 = sand.u32 %s40, 1
        %s131 = scalar_lea.sflag [#allocation3], %s130
        %s132 = sand.u32 %s40, 1
        %s133 = smul.addr %s132, 8
        %s134 = scalar_lea.vmem [#allocation2], %s133
        // Predicated region
        $region25: #{tpu_custom_call.1} parent=23 // pred_check
          %p135 = pneg %p53
        $region26: #{tpu_custom_call.1} parent=23 // pred_check_branch
          %137 = sbr.rel (%p135) target = $region28
        $region27: #{tpu_custom_call.1} parent=23 // pred_region
          %138 = dma.done %s131, 128
        $region28: #{tpu_custom_call.1} parent=23 // pred_fallthru
          _
        %s139 = sand.u32 %s40, 1
        %s140 = scalar_lea.sflag [#allocation3], %s139
        %s141 = sand.u32 %s40, 1
        %s142 = smul.addr %s141, 8
        %s143 = scalar_lea.vmem [#allocation2], %s142
        %p144 = pneg %p53
        %p145 = pneg %p50
        %p146 = pneg %p81
        %p147 = pneg %p78
        %s148 = sand.u32 %s68, 1
        %s149 = scalar_lea.sflag [#allocation4], %s148
        %s150 = sand.u32 %s68, 1
        %s151 = smul.addr %s150, 2
        %s152 = scalar_lea.vmem [#allocation5], %s151
        %s153 = smul.u32 2, %s22
        %v154 = vld [vmem:[%s134] sm:$0xf]
        %v155 = vld [vmem:[%s134 + $0x4] sm:$0xf]
        %vm156 = vcmask 1043456
        %v157 = vsel %vm156, %v154, 0.0
        %v158 = vrot.slane %v157, 4
        %v159 = vadd.f32 %v157, %v158
        %v160 = vrot.slane %v159, 2
        %v161 = vadd.f32 %v159, %v160
        %v162 = vrot.slane %v161, 1
        %v163 = vadd.f32 %v161, %v162
        %v164 = vsel %vm156, %v155, 0.0
        %v165 = vrot.slane %v164, 4
        %v166 = vadd.f32 %v164, %v165
        %v167 = vrot.slane %v166, 2
        %v168 = vadd.f32 %v166, %v167
        %v169 = vrot.slane %v168, 1
        %v170 = vadd.f32 %v168, %v169
        %v171 = vmul.f32 %v163, 0.25
        %v172 = vmul.f32 %v170, 0.25
        %vm175 = vcmask 1041409
        %v176 = vsel %vm175, %v172, %v171
        %178 = vst [vmem:[%s152] sm:$0x3] %v176
        %s179 = sand.u32 %s68, 1
        %s180 = scalar_lea.sflag [#allocation4], %s179
        %s181 = sand.u32 %s68, 1
        %s182 = smul.addr %s181, 2
        %s183 = scalar_lea.vmem [#allocation5], %s182
        // Predicated region
        $region29: #{tpu_custom_call.1} parent=23 // pred_check
          %p184 = pneg %p78
        $region30: #{tpu_custom_call.1} parent=23 // pred_check_branch
          %186 = sbr.rel (%p184) target = $region32
        $region31: #{tpu_custom_call.1} parent=23 // pred_region
          %s188 = ssub.s32 32, 32
          %189 = vsyncadd %s180, %s188
          %s190 = smul.addr %s22, 2
          %s191 = sadd.s32 %s23, %s190
          %s192 = smul.addr %s191, 32
          %s193 = scalar_lea.hbm %s1, %s192
          %s195 = sshll.u32 %s183, 4
          %s196 = int_to_ptr.vmem [resolvable:$true] %s195
          %198 = dma.vmem_to_hbm [thread:$0]  %s196, 32, %s193, %s180
        $region32: #{tpu_custom_call.1} parent=23 // pred_fallthru
          _
      $region24: #{tpu_custom_call.1} parent=5 // pred_fallthru
        _
      %p199 = scmp.le.s32.totalorder 2, %s13
      // Predicated region
      $region33: #{tpu_custom_call.1} parent=5 // pred_check
        %p200 = pneg %p199
      $region34: #{tpu_custom_call.1} parent=5 // pred_check_branch
        %202 = sbr.rel (%p200) target = $region36
      $region35: #{tpu_custom_call.1} parent=5 // pred_region
        %s203 = ssub.s32 %s13, 2
        // Predicated region
        $region37: #{tpu_custom_call.1} parent=35 // pred_check
          %p204 = pneg %p84
        $region38: #{tpu_custom_call.1} parent=35 // pred_check_branch
          %206 = sbr.rel (%p204) target = $region40
        $region39: #{tpu_custom_call.1} parent=35 // pred_region
          %s207 = sand.u32 %s69, 1
          %s208 = scalar_lea.sflag [#allocation4], %s207
          %s209 = sand.u32 %s69, 1
          %s210 = smul.addr %s209, 2
          %s211 = scalar_lea.vmem [#allocation5], %s210
          %212 = dma.done %s208, 32
        $region40: #{tpu_custom_call.1} parent=35 // pred_fallthru
          _
      $region36: #{tpu_custom_call.1} parent=5 // pred_fallthru
        _
    $region6: #{tpu_custom_call.1} parent=1 // loop_footer
      %s17 = sadd.s32 1, %s13
    $region7: #{tpu_custom_call.1} parent=1 // loop_footer_branch
      %12 = sbr.rel target = $region3
    $region8: #{tpu_custom_call.1} parent=1 // loop_exit
      _
    %213 = vsyncpa [#allocation3], 1
    %s214 = scalar_lea.sflag [#allocation3], 1
    %215 = vsyncpa %s214, 1
    %216 = vsyncpa [#allocation4], 1
    %s217 = scalar_lea.sflag [#allocation4], 1
    %218 = vsyncpa %s217, 1

</llo_original>
